<compile_context>
chip_gen: v7x
topology: tpu7x:2x2x1
jax: 0.10.0
libtpu: 0.0.40
codegen_flags: <defaults>
</compile_context>

<pallas_src>
import jax
import jax.numpy as jnp
from jax.experimental import pallas as pl
from jax.experimental.pallas import tpu as pltpu


# Below this element count the pallas_call fixed overhead dominates; use the
# single whole-array-block path (no grid).  Above it, use the tiled path.
_SMALL_THRESHOLD = 1 << 16          # elements
_TILE_ROWS = 512                    # sublanes per block (f32)
_TILE_COLS = 1024                   # lanes per block (multiple of 128)


def _relu_kernel(x_ref, o_ref):
    # Elementwise ReLU; scalar 0.0 avoids materializing a zero-vreg operand
    # (one vld + one vmax + one vst per vreg — v5e's per-bundle optimum).
    o_ref[...] = jnp.maximum(x_ref[...], 0.0)


def _relu_small(flat_2d):
    """Whole-array single-invocation path for tiny slabs (no grid)."""
    return pl.pallas_call(
        _relu_kernel,
        out_shape=jax.ShapeDtypeStruct(flat_2d.shape, flat_2d.dtype),
        in_specs=[pl.BlockSpec(memory_space=pltpu.MemorySpace.VMEM)],
        out_specs=pl.BlockSpec(memory_space=pltpu.MemorySpace.VMEM),
    )(flat_2d)


def _relu_tiled(flat_1d):
    """Lane-dense tiled path for large slabs: (512, 1024) f32 blocks,
    grid axis 'parallel' (megacore / v7x 2-TC sharding)."""
    n = flat_1d.shape[0]
    block_elems = _TILE_ROWS * _TILE_COLS
    padded = pl.cdiv(n, block_elems) * block_elems
    if padded != n:
        flat_1d = jnp.pad(flat_1d, (0, padded - n))
    rows = padded // _TILE_COLS
    slab = flat_1d.reshape(rows, _TILE_COLS)

    out = pl.pallas_call(
        _relu_kernel,
        out_shape=jax.ShapeDtypeStruct((rows, _TILE_COLS), slab.dtype),
        grid=(rows // _TILE_ROWS,),
        in_specs=[pl.BlockSpec((_TILE_ROWS, _TILE_COLS), lambda i: (i, 0))],
        out_specs=pl.BlockSpec((_TILE_ROWS, _TILE_COLS), lambda i: (i, 0)),
        compiler_params=pltpu.CompilerParams(
            dimension_semantics=("parallel",)),
    )(slab)
    return out.reshape(-1)[:n]


def model_forward(x):
    B = x.shape[0]
    total = x.size
    if total % (B * 10) != 0:
        raise ValueError(
            f"x.view(B, 10, -1) requires x.size divisible by {B * 10}, "
            f"got {total}"
        )
    K = total // (B * 10)

    # Hot path: ReLU on the contiguous layout (ReLU commutes with the later
    # permute/reshape, so results are bit-exact).
    if total <= _SMALL_THRESHOLD:
        relu_flat = _relu_small(jnp.reshape(x, (1, total))).reshape(-1)
    else:
        relu_flat = _relu_tiled(jnp.reshape(x, (-1,)))

    # Layout plumbing (z.permute(1,2,0) then "view"(B,-1)) done after ReLU on
    # the result — pure XLA layout ops.
    z_relu = jnp.reshape(relu_flat, (B, 10, K))
    u = jnp.transpose(z_relu, (1, 2, 0))
    # TODO(synk): PyTorch .view on this non-contiguous permuted tensor raises
    # for B > 1; we implement the intended reshape semantics instead.
    v = jnp.reshape(u, (B, -1))
    return v


if __name__ == "__main__":
    key = jax.random.PRNGKey(0)
    # Small shape consistent with the module: total elements must be a
    # multiple of B*10 for x.view(B, 10, -1). (2, 5, 8) -> z = (2, 10, 4).
    x = jax.random.normal(key, (2, 5, 8), dtype=jnp.float32)

    out = jax.block_until_ready(model_forward(x))

    # Pure-JAX reference (relu applied after the permute, as in the module).
    B = x.shape[0]
    z_ref = jnp.reshape(x, (B, 10, -1))
    ref = jnp.maximum(
        jnp.reshape(jnp.transpose(z_ref, (1, 2, 0)), (B, -1)), 0.0
    )
    assert out.shape == (2, 40), out.shape
    assert out.dtype == jnp.float32
    assert jnp.array_equal(out, ref)

    print("KERNEL_OK")
</pallas_src>

<mosaic_0001>
module attributes {stable_mosaic.version = 11 : i64} {
  func.func @_relu_kernel(%arg0: memref<1x80xf32, #tpu.memory_space<vmem>>, %arg1: memref<1x80xf32, #tpu.memory_space<vmem>>) attributes {dimension_semantics = [], scalar_prefetch = 0 : i64, scratch_operands = 0 : i64, tpu.core_type = #tpu.core_type<tc>} {
    %c0 = arith.constant 0 : index
    %c0_0 = arith.constant 0 : index
    %0 = vector.load %arg0[%c0, %c0_0] : memref<1x80xf32, #tpu.memory_space<vmem>>, vector<1x80xf32>
    %cst = arith.constant 0.000000e+00 : f32
    %1 = vector.broadcast %cst : f32 to vector<1x80xf32>
    %2 = arith.maximumf %0, %1 : vector<1x80xf32>
    %c0_1 = arith.constant 0 : index
    %c0_2 = arith.constant 0 : index
    %3 = vector.load %arg1[%c0_1, %c0_2] : memref<1x80xf32, #tpu.memory_space<vmem>>, vector<1x80xf32>
    tpu.vector_store %arg1[%c0_1, %c0_2], %2 {strides = array<i32>} : memref<1x80xf32, #tpu.memory_space<vmem>>, vector<1x80xf32>,
    return
  }
}

</mosaic_0001>

<llo_original>
// kernel: tpu_custom_call.1
$region0: #{tpu_custom_call.1}
  #allocation0 [shape = 'u32[]', space=smem, size = 0x4, offset = 0x4, fixed_abs, tag = 'smem constant byte address 0x4 - core index']
  #allocation1 [shape = 'u32[144,128]{1,0:T(1,128)}', space=vmem, size = 0x12000, scoped, tag = 'internal scratch']
  %s0 = inlined_call_operand.hbm [shape: f32[1,80], index: 0, kind: input, shape index: {}]
  %s1 = inlined_call_operand.hbm [shape: f32[1,80], index: 1, kind: output, shape index: {}]
  %s2 = sld [smem:[#allocation0]]
  $region18: #{tpu_custom_call.1} parent=0
    _
  %s4 = ssub.s32 1, %s2
  %s5 = scalar_select 0, %s4, %s2
  $region1: #{tpu_custom_call.1} parent=0
    #allocation2 [shape = 'u8[512]{0}', space=vmem, size = 0x400, scoped, tag = 'input window, operand 0, single buffered']
    #allocation3 [shape = 's32[1]{0}', space=sflag, size = 0x4, scoped, tag = 'scoped memory for tpu_custom_call.1']
    #allocation4 [shape = 's32[1]{0}', space=sflag, size = 0x4, scoped, tag = 'scoped memory for tpu_custom_call.1']
    #allocation5 [shape = 'u8[512]{0}', space=vmem, size = 0x400, scoped, tag = 'output window, operand 0, single buffered']
    %6 = vsyncpa [#allocation3], 0
    %7 = vsyncpa [#allocation4], 0
    // Predicated region
    $region2: #{tpu_custom_call.1} parent=1 // pred_check
      _
    $region3: #{tpu_custom_call.1} parent=1 // pred_check_branch
      %9 = sbr.rel (0) target = $region5
    $region4: #{tpu_custom_call.1} parent=1 // pred_region
      %s11 = ssub.s32 16, 16
      %12 = vsyncadd [#allocation3], %s11
      %s14 = sshll.u32 [#allocation2], 4
      %s15 = int_to_ptr.vmem [resolvable:$true] %s14
      %17 = dma.hbm_to_vmem [thread:$0]  %s0, 16, %s15, [#allocation3]
    $region5: #{tpu_custom_call.1} parent=1 // pred_fallthru
      _
    // Predicated region
    $region6: #{tpu_custom_call.1} parent=1 // pred_check
      _
    $region7: #{tpu_custom_call.1} parent=1 // pred_check_branch
      %19 = sbr.rel (0) target = $region9
    $region8: #{tpu_custom_call.1} parent=1 // pred_region
      %20 = dma.done [#allocation3], 16
    $region9: #{tpu_custom_call.1} parent=1 // pred_fallthru
      _
    %v21 = vld [vmem:[#allocation2] sm:$0x1]
    %v22 = vmax.f32 %v21, 0.0
    %vm23 = vcmask 647168
    %24 = vst.msk [vmem:[#allocation5] sm:$0x1] %vm23, %v22
    // Predicated region
    $region10: #{tpu_custom_call.1} parent=1 // pred_check
      _
    $region11: #{tpu_custom_call.1} parent=1 // pred_check_branch
      %26 = sbr.rel (0) target = $region13
    $region12: #{tpu_custom_call.1} parent=1 // pred_region
      %s28 = ssub.s32 16, 16
      %29 = vsyncadd [#allocation4], %s28
      %s31 = sshll.u32 [#allocation5], 4
      %s32 = int_to_ptr.vmem [resolvable:$true] %s31
      %34 = dma.vmem_to_hbm [thread:$0]  %s32, 16, %s1, [#allocation4]
    $region13: #{tpu_custom_call.1} parent=1 // pred_fallthru
      _
    // Predicated region
    $region14: #{tpu_custom_call.1} parent=1 // pred_check
      _
    $region15: #{tpu_custom_call.1} parent=1 // pred_check_branch
      %36 = sbr.rel (0) target = $region17
    $region16: #{tpu_custom_call.1} parent=1 // pred_region
      %37 = dma.done [#allocation4], 16
    $region17: #{tpu_custom_call.1} parent=1 // pred_fallthru
      _
    %38 = vsyncpa [#allocation3], 1
    %39 = vsyncpa [#allocation4], 1

</llo_original>
